<compile_context>
chip_gen: v6e
topology: v6e:2x2x1
jax: 0.10.0
libtpu: 0.0.40
codegen_flags: <defaults>
</compile_context>

<pallas_src>
import functools

import jax
import jax.numpy as jnp
from jax.experimental import pallas as pl
from jax.experimental.pallas import tpu as pltpu

_LANES = 128
_SUBLANES = 8
_ROW_ALIGN = 32               # covers f32 (8), bf16 (16), int8/fp8 (32) packing


@functools.lru_cache(maxsize=1)
def _chip_config():
    """Per-generation tiling config: (num_slices, max_f32_block_rows, vmem_limit)."""
    kind = ""
    try:
        kind = jax.devices()[0].device_kind.lower()
    except Exception:  # pragma: no cover - backend query failure -> conservative
        pass
    if "v7" in kind or "7x" in kind:
        # 2 TensorCores/chip, 64 MiB VMEM: 4 MiB/input block, 2 bufs, 2 inputs ~= 16 MiB.
        return 2, 8192, 24 << 20
    if "v6" in kind:
        # 1 TC, 128 MiB VMEM: 8 MiB/input block, double-buffered -> 32 MiB.
        return 1, 16384, 48 << 20
    # v5e / v5p / unknown: stay inside the 16 MiB default scoped VMEM.
    return 1, 4096, None


def _iou_partial_kernel(n_ref, t_ref, x_ref, out_ref, *,
                        threshold, block_rows, blocks_per_slice):
    """Accumulates lane-wise partial sums [sum(t_), sum(x_), sum(x_*t_)].

    out_ref block: (1, 3, 8, 128) f32, resident across the (arbitrary) tile axis.
    """
    c = pl.program_id(0)          # TensorCore slice (parallel)
    i = pl.program_id(1)          # tile index within the slice (arbitrary)

    @pl.when(i == 0)
    def _init():
        out_ref[...] = jnp.zeros_like(out_ref)

    n = n_ref[0]
    block_elems = block_rows * _LANES
    blk = c * blocks_per_slice + i          # intended (unclamped) global tile id
    start = blk * block_elems

    t = t_ref[...]
    x = x_ref[...]

    def _lane_sum(v):
        # (block_rows, 128) -> (8, 128) by elementwise vreg adds (pure VPU).
        return jnp.sum(v.reshape(block_rows // _SUBLANES, _SUBLANES, _LANES), axis=0)

    def _accumulate(t_bool, x_bool):
        t_ = t_bool.astype(jnp.float32)
        x_ = x_bool.astype(jnp.float32)
        inter = x_ * t_
        # Direct sublane-aligned accumulation: no stack/concat temporaries.
        out_ref[0, 0] = out_ref[0, 0] + _lane_sum(t_)
        out_ref[0, 1] = out_ref[0, 1] + _lane_sum(x_)
        out_ref[0, 2] = out_ref[0, 2] + _lane_sum(inter)

    fully_valid = start + block_elems <= n

    @pl.when(fully_valid)
    def _fast():                                    # interior tile: no mask work
        _accumulate(t > threshold, x > threshold)

    @pl.when(jnp.logical_not(fully_valid) & (start < n))
    def _masked():                                  # the single tile straddling n
        # valid  <=>  start + row*128 + col < n  <=>  row*128 < (n - start) - col
        row_i = jax.lax.broadcasted_iota(jnp.int32, (block_rows, 1), 0)
        col_i = jax.lax.broadcasted_iota(jnp.int32, (1, _LANES), 1)
        rem = n - start
        valid = (row_i * _LANES) < (rem - col_i)    # broadcasts to (block_rows, 128) bool
        _accumulate((t > threshold) & valid, (x > threshold) & valid)
    # Tiles with start >= n (duplicates from the index-map clamp) do no compute.


def _as_lane_rows(arr):
    """Flatten to (rows, 128) in native dtype; rows padded up to a multiple of 32."""
    flat = arr.reshape(-1)
    n = flat.shape[0]
    rows = -(-n // _LANES)
    rows = -(-rows // _ROW_ALIGN) * _ROW_ALIGN
    total = rows * _LANES
    if total != n:
        flat = jnp.pad(flat, (0, total - n))
    return flat.reshape(rows, _LANES), n


@functools.partial(jax.jit, static_argnames=("threshold",))
def iou_metric(target, inp, threshold=0.5):
    """Returns jnp.array([acc, recall, precision, iou], f32) matching IoU.forward."""
    t2d, n = _as_lane_rows(target)
    x2d, n_x = _as_lane_rows(inp)
    assert n == n_x, "target/input element counts must match"
    # Flat-index math inside the kernel is int32.
    assert n < 2**31, "IoU kernel supports at most 2**31 - 1 elements"

    num_slices, max_f32_rows, vmem_limit = _chip_config()

    # Scale the block with dtype width so the per-block byte footprint is constant.
    itemsize = max(jnp.dtype(target.dtype).itemsize, jnp.dtype(inp.dtype).itemsize)
    max_block_rows = max_f32_rows * max(1, 4 // itemsize)

    rows = t2d.shape[0]
    block_rows = max(_ROW_ALIGN, min(max_block_rows, rows))   # rows is already %32 == 0
    nblk = pl.cdiv(rows, block_rows)
    blocks_per_slice = pl.cdiv(nblk, num_slices)

    def in_map(c, i, n_ref):
        # Clamp so out-of-range (c, i) pairs re-read a valid tile; the kernel
        # skips / masks their contribution via the start/n check.
        return (jnp.minimum(c * blocks_per_slice + i, nblk - 1), 0)

    def out_map(c, i, n_ref):
        return (c, 0, 0, 0)

    kernel = functools.partial(
        _iou_partial_kernel,
        threshold=float(threshold),
        block_rows=block_rows,
        blocks_per_slice=blocks_per_slice,
    )

    bytes_accessed = n * (target.dtype.itemsize + inp.dtype.itemsize)
    cost = pl.CostEstimate(flops=8 * n, transcendentals=0,
                           bytes_accessed=bytes_accessed)

    cp_kwargs = dict(dimension_semantics=("parallel", "arbitrary"))
    if vmem_limit is not None:
        cp_kwargs["vmem_limit_bytes"] = vmem_limit

    partials = pl.pallas_call(
        kernel,
        out_shape=jax.ShapeDtypeStruct((num_slices, 3, _SUBLANES, _LANES),
                                       jnp.float32),
        grid_spec=pltpu.PrefetchScalarGridSpec(
            num_scalar_prefetch=1,
            grid=(num_slices, blocks_per_slice),
            in_specs=[
                pl.BlockSpec((block_rows, _LANES), in_map),
                pl.BlockSpec((block_rows, _LANES), in_map),
            ],
            out_specs=pl.BlockSpec((1, 3, _SUBLANES, _LANES), out_map),
        ),
        compiler_params=pltpu.CompilerParams(**cp_kwargs),
        cost_estimate=cost,
    )(jnp.array([n], dtype=jnp.int32), t2d, x2d)

    sums = jnp.sum(partials, axis=(0, 2, 3))        # (3,): [sum_t, sum_x, sum_inter]
    s_t, s_x, s_inter = sums[0], sums[1], sums[2]

    count = jnp.float32(n)
    s_union = s_x + s_t - s_inter                   # clamp(x_+t_,0,1) summed
    s_eq = count - s_x - s_t + 2.0 * s_inter        # sum(x_ == t_) for binary x_, t_

    eps = jnp.float32(1e-10)
    mean_inter = s_inter / count
    metrics = jnp.stack([
        s_eq / count,          # acc
        s_inter / s_t,         # recall
        s_inter / s_x,         # precision
        s_inter / s_union,     # iou
    ])
    zeros = jnp.zeros((4,), dtype=jnp.float32)
    # torch returns all-zeros when mean(intersection) < eps
    return jnp.where(mean_inter < eps, zeros, metrics)


if __name__ == "__main__":
    key = jax.random.PRNGKey(0)
    k1, k2 = jax.random.split(key)
    # NCHW-shaped probability maps (e.g. segmentation outputs after sigmoid).
    target = jax.random.uniform(k1, (2, 4, 16, 16), dtype=jnp.float32)
    inp = jax.random.uniform(k2, (2, 4, 16, 16), dtype=jnp.float32)

    out = iou_metric(target, inp, threshold=0.5)
    out = jax.block_until_ready(out)

    # Pure-JAX reference for sanity.
    t_ = (target > 0.5).astype(jnp.float32)
    x_ = (inp > 0.5).astype(jnp.float32)
    inter = jnp.clip(x_ * t_, 0, 1)
    union = jnp.clip(x_ + t_, 0, 1)
    if float(jnp.mean(inter)) < 1e-10:
        ref = jnp.zeros((4,), jnp.float32)
    else:
        ref = jnp.stack([
            jnp.mean((x_ == t_).astype(jnp.float32)),
            jnp.mean(inter) / jnp.mean(t_),
            jnp.mean(inter) / jnp.mean(x_),
            jnp.mean(inter) / jnp.mean(union),
        ])
    assert jnp.allclose(out, ref, atol=1e-5), (out, ref)

    print("KERNEL_OK")
</pallas_src>

<mosaic_0001>
module attributes {stable_mosaic.version = 11 : i64} {
  func.func @_iou_partial_kernel(%arg0: i32, %arg1: i32, %arg2: memref<1xi32, #tpu.memory_space<smem>>, %arg3: memref<32x128xf32, #tpu.memory_space<vmem>>, %arg4: memref<32x128xf32, #tpu.memory_space<vmem>>, %arg5: memref<1x3x8x128xf32, #tpu.memory_space<vmem>>) attributes {dimension_semantics = [#tpu.dimension_semantics<parallel>, #tpu.dimension_semantics<arbitrary>], iteration_bounds = array<i64: 1, 1>, scalar_prefetch = 1 : i64, scratch_operands = 0 : i64, tpu.core_type = #tpu.core_type<tc>, window_params = [{transform_indices = @transform_0, window_bounds = array<i64: 32, 128>}, {transform_indices = @transform_1, window_bounds = array<i64: 32, 128>}, {transform_indices = @transform_2, window_bounds = array<i64: 1, 3, 8, 128>}]} {
    %c0_i32 = arith.constant 0 : i32
    %0 = arith.cmpi eq, %arg1, %c0_i32 : i32
    %1 = arith.extui %0 : i1 to i32
    %c0_i32_0 = arith.constant 0 : i32
    %2 = arith.cmpi ne, %1, %c0_i32_0 : i32
    scf.if %2 {
      %cst = arith.constant 0.000000e+00 : f32
      %18 = vector.broadcast %cst : f32 to vector<1x3x8x128xf32>
      %c0_8 = arith.constant 0 : index
      %c0_9 = arith.constant 0 : index
      %c0_10 = arith.constant 0 : index
      %c0_11 = arith.constant 0 : index
      %19 = vector.load %arg5[%c0_8, %c0_9, %c0_10, %c0_11] : memref<1x3x8x128xf32, #tpu.memory_space<vmem>>, vector<1x3x8x128xf32>
      tpu.vector_store %arg5[%c0_8, %c0_9, %c0_10, %c0_11], %18 {strides = array<i32>} : memref<1x3x8x128xf32, #tpu.memory_space<vmem>>, vector<1x3x8x128xf32>,
    } else {
    }
    %c0 = arith.constant 0 : index
    %3 = memref.load %arg2[%c0] : memref<1xi32, #tpu.memory_space<smem>>
    %c1_i32 = arith.constant 1 : i32
    %4 = arith.muli %arg0, %c1_i32 : i32
    %5 = arith.addi %4, %arg1 : i32
    %c4096_i32 = arith.constant 4096 : i32
    %6 = arith.muli %5, %c4096_i32 : i32
    %c0_1 = arith.constant 0 : index
    %c0_2 = arith.constant 0 : index
    %7 = vector.load %arg3[%c0_1, %c0_2] : memref<32x128xf32, #tpu.memory_space<vmem>>, vector<32x128xf32>
    %c0_3 = arith.constant 0 : index
    %c0_4 = arith.constant 0 : index
    %8 = vector.load %arg4[%c0_3, %c0_4] : memref<32x128xf32, #tpu.memory_space<vmem>>, vector<32x128xf32>
    %c4096_i32_5 = arith.constant 4096 : i32
    %9 = arith.addi %6, %c4096_i32_5 : i32
    %10 = arith.cmpi sle, %9, %3 : i32
    %11 = arith.extui %10 : i1 to i32
    %c0_i32_6 = arith.constant 0 : i32
    %12 = arith.cmpi ne, %11, %c0_i32_6 : i32
    scf.if %12 {
      %cst = arith.constant 5.000000e-01 : f32
      %18 = vector.broadcast %cst : f32 to vector<32x128xf32>
      %19 = arith.cmpf ogt, %7, %18 : vector<32x128xf32>
      %cst_8 = arith.constant 5.000000e-01 : f32
      %20 = vector.broadcast %cst_8 : f32 to vector<32x128xf32>
      %21 = arith.cmpf ogt, %8, %20 : vector<32x128xf32>
      %22 = arith.extui %19 : vector<32x128xi1> to vector<32x128xi32>
      %23 = arith.sitofp %22 : vector<32x128xi32> to vector<32x128xf32>
      %24 = arith.extui %21 : vector<32x128xi1> to vector<32x128xi32>
      %25 = arith.sitofp %24 : vector<32x128xi32> to vector<32x128xf32>
      %26 = arith.mulf %25, %23 : vector<32x128xf32>
      %c0_9 = arith.constant 0 : index
      %c0_10 = arith.constant 0 : index
      %c0_11 = arith.constant 0 : index
      %c0_12 = arith.constant 0 : index
      %27 = vector.load %arg5[%c0_9, %c0_10, %c0_11, %c0_12] : memref<1x3x8x128xf32, #tpu.memory_space<vmem>>, vector<1x1x8x128xf32>
      %28 = vector.shape_cast %27 : vector<1x1x8x128xf32> to vector<8x128xf32>
      %29 = vector.shape_cast %23 : vector<32x128xf32> to vector<4x8x128xf32>
      %cst_13 = arith.constant dense<0.000000e+00> : vector<8x128xf32>
      %30 = vector.multi_reduction <add>, %29, %cst_13 [0] : vector<4x8x128xf32> to vector<8x128xf32>
      %31 = arith.addf %28, %30 : vector<8x128xf32>
      %c0_14 = arith.constant 0 : index
      %c0_15 = arith.constant 0 : index
      %c0_16 = arith.constant 0 : index
      %c0_17 = arith.constant 0 : index
      %32 = vector.load %arg5[%c0_14, %c0_15, %c0_16, %c0_17] : memref<1x3x8x128xf32, #tpu.memory_space<vmem>>, vector<1x1x8x128xf32>
      %33 = vector.shape_cast %32 : vector<1x1x8x128xf32> to vector<8x128xf32>
      %34 = vector.shape_cast %31 : vector<8x128xf32> to vector<1x1x8x128xf32>
      tpu.vector_store %arg5[%c0_14, %c0_15, %c0_16, %c0_17], %34 {strides = array<i32>} : memref<1x3x8x128xf32, #tpu.memory_space<vmem>>, vector<1x1x8x128xf32>,
      %c0_18 = arith.constant 0 : index
      %c1 = arith.constant 1 : index
      %c0_19 = arith.constant 0 : index
      %c0_20 = arith.constant 0 : index
      %35 = vector.load %arg5[%c0_18, %c1, %c0_19, %c0_20] : memref<1x3x8x128xf32, #tpu.memory_space<vmem>>, vector<1x1x8x128xf32>
      %36 = vector.shape_cast %35 : vector<1x1x8x128xf32> to vector<8x128xf32>
      %37 = vector.shape_cast %25 : vector<32x128xf32> to vector<4x8x128xf32>
      %cst_21 = arith.constant dense<0.000000e+00> : vector<8x128xf32>
      %38 = vector.multi_reduction <add>, %37, %cst_21 [0] : vector<4x8x128xf32> to vector<8x128xf32>
      %39 = arith.addf %36, %38 : vector<8x128xf32>
      %c0_22 = arith.constant 0 : index
      %c1_23 = arith.constant 1 : index
      %c0_24 = arith.constant 0 : index
      %c0_25 = arith.constant 0 : index
      %40 = vector.load %arg5[%c0_22, %c1_23, %c0_24, %c0_25] : memref<1x3x8x128xf32, #tpu.memory_space<vmem>>, vector<1x1x8x128xf32>
      %41 = vector.shape_cast %40 : vector<1x1x8x128xf32> to vector<8x128xf32>
      %42 = vector.shape_cast %39 : vector<8x128xf32> to vector<1x1x8x128xf32>
      tpu.vector_store %arg5[%c0_22, %c1_23, %c0_24, %c0_25], %42 {strides = array<i32>} : memref<1x3x8x128xf32, #tpu.memory_space<vmem>>, vector<1x1x8x128xf32>,
      %c0_26 = arith.constant 0 : index
      %c2 = arith.constant 2 : index
      %c0_27 = arith.constant 0 : index
      %c0_28 = arith.constant 0 : index
      %43 = vector.load %arg5[%c0_26, %c2, %c0_27, %c0_28] : memref<1x3x8x128xf32, #tpu.memory_space<vmem>>, vector<1x1x8x128xf32>
      %44 = vector.shape_cast %43 : vector<1x1x8x128xf32> to vector<8x128xf32>
      %45 = vector.shape_cast %26 : vector<32x128xf32> to vector<4x8x128xf32>
      %cst_29 = arith.constant dense<0.000000e+00> : vector<8x128xf32>
      %46 = vector.multi_reduction <add>, %45, %cst_29 [0] : vector<4x8x128xf32> to vector<8x128xf32>
      %47 = arith.addf %44, %46 : vector<8x128xf32>
      %c0_30 = arith.constant 0 : index
      %c2_31 = arith.constant 2 : index
      %c0_32 = arith.constant 0 : index
      %c0_33 = arith.constant 0 : index
      %48 = vector.load %arg5[%c0_30, %c2_31, %c0_32, %c0_33] : memref<1x3x8x128xf32, #tpu.memory_space<vmem>>, vector<1x1x8x128xf32>
      %49 = vector.shape_cast %48 : vector<1x1x8x128xf32> to vector<8x128xf32>
      %50 = vector.shape_cast %47 : vector<8x128xf32> to vector<1x1x8x128xf32>
      tpu.vector_store %arg5[%c0_30, %c2_31, %c0_32, %c0_33], %50 {strides = array<i32>} : memref<1x3x8x128xf32, #tpu.memory_space<vmem>>, vector<1x1x8x128xf32>,
    } else {
    }
    %true = arith.constant true
    %13 = arith.xori %10, %true : i1
    %14 = arith.cmpi slt, %6, %3 : i32
    %15 = arith.andi %13, %14 : i1
    %16 = arith.extui %15 : i1 to i32
    %c0_i32_7 = arith.constant 0 : i32
    %17 = arith.cmpi ne, %16, %c0_i32_7 : i32
    scf.if %17 {
      %18 = tpu.iota {dimensions = array<i32: 0>} : vector<32x1xi32>
      %19 = tpu.iota {dimensions = array<i32: 1>} : vector<1x128xi32>
      %20 = arith.subi %3, %6 : i32
      %c128_i32 = arith.constant 128 : i32
      %21 = vector.broadcast %c128_i32 : i32 to vector<32x1xi32>
      %22 = arith.muli %18, %21 : vector<32x1xi32>
      %23 = vector.broadcast %20 : i32 to vector<1x128xi32>
      %24 = arith.subi %23, %19 : vector<1x128xi32>
      %25 = vector.broadcast %22 : vector<32x1xi32> to vector<32x128xi32>
      %26 = vector.broadcast %24 : vector<1x128xi32> to vector<32x128xi32>
      %27 = arith.cmpi slt, %25, %26 : vector<32x128xi32>
      %cst = arith.constant 5.000000e-01 : f32
      %28 = vector.broadcast %cst : f32 to vector<32x128xf32>
      %29 = arith.cmpf ogt, %7, %28 : vector<32x128xf32>
      %30 = arith.andi %29, %27 : vector<32x128xi1>
      %cst_8 = arith.constant 5.000000e-01 : f32
      %31 = vector.broadcast %cst_8 : f32 to vector<32x128xf32>
      %32 = arith.cmpf ogt, %8, %31 : vector<32x128xf32>
      %33 = arith.andi %32, %27 : vector<32x128xi1>
      %34 = arith.extui %30 : vector<32x128xi1> to vector<32x128xi32>
      %35 = arith.sitofp %34 : vector<32x128xi32> to vector<32x128xf32>
      %36 = arith.extui %33 : vector<32x128xi1> to vector<32x128xi32>
      %37 = arith.sitofp %36 : vector<32x128xi32> to vector<32x128xf32>
      %38 = arith.mulf %37, %35 : vector<32x128xf32>
      %c0_9 = arith.constant 0 : index
      %c0_10 = arith.constant 0 : index
      %c0_11 = arith.constant 0 : index
      %c0_12 = arith.constant 0 : index
      %39 = vector.load %arg5[%c0_9, %c0_10, %c0_11, %c0_12] : memref<1x3x8x128xf32, #tpu.memory_space<vmem>>, vector<1x1x8x128xf32>
      %40 = vector.shape_cast %39 : vector<1x1x8x128xf32> to vector<8x128xf32>
      %41 = vector.shape_cast %35 : vector<32x128xf32> to vector<4x8x128xf32>
      %cst_13 = arith.constant dense<0.000000e+00> : vector<8x128xf32>
      %42 = vector.multi_reduction <add>, %41, %cst_13 [0] : vector<4x8x128xf32> to vector<8x128xf32>
      %43 = arith.addf %40, %42 : vector<8x128xf32>
      %c0_14 = arith.constant 0 : index
      %c0_15 = arith.constant 0 : index
      %c0_16 = arith.constant 0 : index
      %c0_17 = arith.constant 0 : index
      %44 = vector.load %arg5[%c0_14, %c0_15, %c0_16, %c0_17] : memref<1x3x8x128xf32, #tpu.memory_space<vmem>>, vector<1x1x8x128xf32>
      %45 = vector.shape_cast %44 : vector<1x1x8x128xf32> to vector<8x128xf32>
      %46 = vector.shape_cast %43 : vector<8x128xf32> to vector<1x1x8x128xf32>
      tpu.vector_store %arg5[%c0_14, %c0_15, %c0_16, %c0_17], %46 {strides = array<i32>} : memref<1x3x8x128xf32, #tpu.memory_space<vmem>>, vector<1x1x8x128xf32>,
      %c0_18 = arith.constant 0 : index
      %c1 = arith.constant 1 : index
      %c0_19 = arith.constant 0 : index
      %c0_20 = arith.constant 0 : index
      %47 = vector.load %arg5[%c0_18, %c1, %c0_19, %c0_20] : memref<1x3x8x128xf32, #tpu.memory_space<vmem>>, vector<1x1x8x128xf32>
      %48 = vector.shape_cast %47 : vector<1x1x8x128xf32> to vector<8x128xf32>
      %49 = vector.shape_cast %37 : vector<32x128xf32> to vector<4x8x128xf32>
      %cst_21 = arith.constant dense<0.000000e+00> : vector<8x128xf32>
      %50 = vector.multi_reduction <add>, %49, %cst_21 [0] : vector<4x8x128xf32> to vector<8x128xf32>
      %51 = arith.addf %48, %50 : vector<8x128xf32>
      %c0_22 = arith.constant 0 : index
      %c1_23 = arith.constant 1 : index
      %c0_24 = arith.constant 0 : index
      %c0_25 = arith.constant 0 : index
      %52 = vector.load %arg5[%c0_22, %c1_23, %c0_24, %c0_25] : memref<1x3x8x128xf32, #tpu.memory_space<vmem>>, vector<1x1x8x128xf32>
      %53 = vector.shape_cast %52 : vector<1x1x8x128xf32> to vector<8x128xf32>
      %54 = vector.shape_cast %51 : vector<8x128xf32> to vector<1x1x8x128xf32>
      tpu.vector_store %arg5[%c0_22, %c1_23, %c0_24, %c0_25], %54 {strides = array<i32>} : memref<1x3x8x128xf32, #tpu.memory_space<vmem>>, vector<1x1x8x128xf32>,
      %c0_26 = arith.constant 0 : index
      %c2 = arith.constant 2 : index
      %c0_27 = arith.constant 0 : index
      %c0_28 = arith.constant 0 : index
      %55 = vector.load %arg5[%c0_26, %c2, %c0_27, %c0_28] : memref<1x3x8x128xf32, #tpu.memory_space<vmem>>, vector<1x1x8x128xf32>
      %56 = vector.shape_cast %55 : vector<1x1x8x128xf32> to vector<8x128xf32>
      %57 = vector.shape_cast %38 : vector<32x128xf32> to vector<4x8x128xf32>
      %cst_29 = arith.constant dense<0.000000e+00> : vector<8x128xf32>
      %58 = vector.multi_reduction <add>, %57, %cst_29 [0] : vector<4x8x128xf32> to vector<8x128xf32>
      %59 = arith.addf %56, %58 : vector<8x128xf32>
      %c0_30 = arith.constant 0 : index
      %c2_31 = arith.constant 2 : index
      %c0_32 = arith.constant 0 : index
      %c0_33 = arith.constant 0 : index
      %60 = vector.load %arg5[%c0_30, %c2_31, %c0_32, %c0_33] : memref<1x3x8x128xf32, #tpu.memory_space<vmem>>, vector<1x1x8x128xf32>
      %61 = vector.shape_cast %60 : vector<1x1x8x128xf32> to vector<8x128xf32>
      %62 = vector.shape_cast %59 : vector<8x128xf32> to vector<1x1x8x128xf32>
      tpu.vector_store %arg5[%c0_30, %c2_31, %c0_32, %c0_33], %62 {strides = array<i32>} : memref<1x3x8x128xf32, #tpu.memory_space<vmem>>, vector<1x1x8x128xf32>,
    } else {
    }
    return
  }
  func.func @transform_0(%arg0: i32, %arg1: i32, %arg2: memref<1xi32, #tpu.memory_space<smem>>) -> (i32, i32) {
    %c1_i32 = arith.constant 1 : i32
    %0 = arith.muli %arg0, %c1_i32 : i32
    %1 = arith.addi %0, %arg1 : i32
    %c0_i32 = arith.constant 0 : i32
    %2 = arith.minsi %1, %c0_i32 : i32
    %c0_i32_0 = arith.constant 0 : i32
    %c0_i32_1 = arith.constant 0 : i32
    return %2, %c0_i32_0 : i32, i32
  }
  func.func @transform_1(%arg0: i32, %arg1: i32, %arg2: memref<1xi32, #tpu.memory_space<smem>>) -> (i32, i32) {
    %c1_i32 = arith.constant 1 : i32
    %0 = arith.muli %arg0, %c1_i32 : i32
    %1 = arith.addi %0, %arg1 : i32
    %c0_i32 = arith.constant 0 : i32
    %2 = arith.minsi %1, %c0_i32 : i32
    %c0_i32_0 = arith.constant 0 : i32
    %c0_i32_1 = arith.constant 0 : i32
    return %2, %c0_i32_0 : i32, i32
  }
  func.func @transform_2(%arg0: i32, %arg1: i32, %arg2: memref<1xi32, #tpu.memory_space<smem>>) -> (i32, i32, i32, i32) {
    %c0_i32 = arith.constant 0 : i32
    %c0_i32_0 = arith.constant 0 : i32
    %c0_i32_1 = arith.constant 0 : i32
    %c0_i32_2 = arith.constant 0 : i32
    return %arg0, %c0_i32, %c0_i32_0, %c0_i32_1 : i32, i32, i32, i32
  }
}

</mosaic_0001>

<llo_original>
// kernel: iou_metric.1
$region0: #{iou_metric.1}
  #allocation0 [shape = 'u32[]', space=smem, size = 0x4, offset = 0x4, fixed_abs, tag = 'smem constant byte address 0x4 - core index']
  #allocation1 [shape = 'u32[144,128]{1,0:T(1,128)}', space=vmem, size = 0x12000, scoped, tag = 'internal scratch']
  #allocation2 [shape = 's32[1]{0}', space=sflag, size = 0x4, scoped, tag = 'scoped memory for iou_metric.1']
  #allocation3 [shape = 's32[1]{0:T(128)S(6)}', space=smem, size = 0x200, scoped, tag = 'prefetched SMEM operand 0']
  %s0 = inlined_call_operand.<no memory space> [shape: s32[1], index: 0, kind: input, shape index: {}]
  %s1 = inlined_call_operand.vmem [shape: f32[32,128], index: 1, kind: input, shape index: {}]
  %s2 = inlined_call_operand.vmem [shape: f32[32,128], index: 2, kind: input, shape index: {}]
  %s3 = inlined_call_operand.vmem [shape: f32[1,3,8,128], index: 3, kind: output, shape index: {}]
  %s4 = sld [smem:[#allocation0]]
  $region30: #{iou_metric.1} parent=0
    _
  %s6 = ssub.s32 1, %s4
  %s7 = scalar_select 0, %s6, %s4
  %8 = sst [smem:[#allocation3]] %s0
  // Predicated region
  $region2: #{iou_metric.1} parent=0 // pred_check
    _
  $region3: #{iou_metric.1} parent=0 // pred_check_branch
    %10 = sbr.rel (0) target = $region5
  $region4: #{iou_metric.1} parent=0 // pred_region
    %s11 = sadd.s32 0, 0
    %p12 = scmp.lt.s32.totalorder %s11, 0
    %s13 = scalar_select %p12, %s11, 0
    %s14 = smul.u32 4, %s13
    %p15 = scmp.lt.s32.totalorder %s14, 3
    %s16 = scalar_select %p15, %s14, 3
    %s17 = smul.addr %s16, 8
    %s18 = scalar_lea.vmem %s1, %s17
    %s19 = sadd.s32 0, 0
    %p20 = scmp.lt.s32.totalorder %s19, 0
    %s21 = scalar_select %p20, %s19, 0
    %s22 = smul.u32 4, %s21
  $region5: #{iou_metric.1} parent=0 // pred_fallthru
    _
  // Predicated region
  $region6: #{iou_metric.1} parent=0 // pred_check
    _
  $region7: #{iou_metric.1} parent=0 // pred_check_branch
    %24 = sbr.rel (0) target = $region9
  $region8: #{iou_metric.1} parent=0 // pred_region
    %s25 = sadd.s32 0, 0
    %p26 = scmp.lt.s32.totalorder %s25, 0
    %s27 = scalar_select %p26, %s25, 0
    %s28 = smul.u32 4, %s27
    %p29 = scmp.lt.s32.totalorder %s28, 3
    %s30 = scalar_select %p29, %s28, 3
    %s31 = smul.addr %s30, 8
    %s32 = scalar_lea.vmem %s2, %s31
    %s33 = sadd.s32 0, 0
    %p34 = scmp.lt.s32.totalorder %s33, 0
    %s35 = scalar_select %p34, %s33, 0
    %s36 = smul.u32 4, %s35
  $region9: #{iou_metric.1} parent=0 // pred_fallthru
    _
  %s37 = sadd.s32 0, 0
  %p38 = scmp.lt.s32.totalorder %s37, 0
  %s39 = scalar_select %p38, %s37, 0
  %s40 = smul.u32 4, %s39
  %p41 = scmp.lt.s32.totalorder %s40, 3
  %s42 = scalar_select %p41, %s40, 3
  %s43 = smul.addr %s42, 8
  %s44 = scalar_lea.vmem %s1, %s43
  %s45 = sadd.s32 0, 0
  %p46 = scmp.lt.s32.totalorder %s45, 0
  %s47 = scalar_select %p46, %s45, 0
  %s48 = smul.u32 4, %s47
  %p49 = scmp.lt.s32.totalorder %s48, 3
  %s50 = scalar_select %p49, %s48, 3
  %s51 = smul.addr %s50, 8
  %s52 = scalar_lea.vmem %s2, %s51
  %s53 = sadd.s32 0, 0
  %p54 = scmp.lt.s32.totalorder %s53, 0
  %s55 = scalar_select %p54, %s53, 0
  %s56 = smul.u32 4, %s55
  %p57 = scmp.lt.s32.totalorder %s56, 3
  %s58 = scalar_select %p57, %s56, 3
  %s59 = smul.addr %s58, 8
  %s60 = scalar_lea.vmem %s1, %s59
  %s61 = sadd.s32 0, 0
  %p62 = scmp.lt.s32.totalorder %s61, 0
  %s63 = scalar_select %p62, %s61, 0
  %s64 = smul.u32 4, %s63
  %s65 = sadd.s32 0, 0
  %p66 = scmp.lt.s32.totalorder %s65, 0
  %s67 = scalar_select %p66, %s65, 0
  %s68 = smul.u32 4, %s67
  %p69 = scmp.lt.s32.totalorder %s68, 3
  %s70 = scalar_select %p69, %s68, 3
  %s71 = smul.addr %s70, 8
  %s72 = scalar_lea.vmem %s2, %s71
  %s73 = sadd.s32 0, 0
  %p74 = scmp.lt.s32.totalorder %s73, 0
  %s75 = scalar_select %p74, %s73, 0
  %s76 = smul.u32 4, %s75
  %p77 = scmp.eq.s32.totalorder 0, 0
  // Predicated region
  $region10: #{iou_metric.1} parent=0 // pred_check
    %p78 = pneg %p77
  $region11: #{iou_metric.1} parent=0 // pred_check_branch
    %80 = sbr.rel (%p78) target = $region13
  $region12: #{iou_metric.1} parent=0 // pred_region
    %81 = vst [vmem:[%s3] sm:$0xff] 0.0
    %82 = vst [vmem:[%s3 + $0x8] sm:$0xff] 0.0
    %83 = vst [vmem:[%s3 + $0x10] sm:$0xff] 0.0
  $region13: #{iou_metric.1} parent=0 // pred_fallthru
    _
  %s84 = sld [smem:[#allocation3]]
  %s85 = sadd.s32 0, 0
  %s86 = smul.u32 %s85, 4096
  %v87 = vld [vmem:[%s60] sm:$0xff]
  %v88 = vld [vmem:[%s60 + $0x8] sm:$0xff]
  %v89 = vld [vmem:[%s60 + $0x10] sm:$0xff]
  %v90 = vld [vmem:[%s60 + $0x18] sm:$0xff]
  %v91 = vld [vmem:[%s72] sm:$0xff]
  %v92 = vld [vmem:[%s72 + $0x8] sm:$0xff]
  %v93 = vld [vmem:[%s72 + $0x10] sm:$0xff]
  %v94 = vld [vmem:[%s72 + $0x18] sm:$0xff]
  %s95 = sadd.s32 %s86, 4096
  %p96 = scmp.le.s32.totalorder %s95, %s84
  // Predicated region
  $region14: #{iou_metric.1} parent=0 // pred_check
    %p97 = pneg %p96
  $region15: #{iou_metric.1} parent=0 // pred_check_branch
    %99 = sbr.rel (%p97) target = $region17
  $region16: #{iou_metric.1} parent=0 // pred_region
    %vm100 = vcmp.gt.f32.partialorder %v87, 0.5
    %vm101 = vcmp.gt.f32.partialorder %v88, 0.5
    %vm102 = vcmp.gt.f32.partialorder %v89, 0.5
    %vm103 = vcmp.gt.f32.partialorder %v90, 0.5
    %vm104 = vcmp.gt.f32.partialorder %v91, 0.5
    %vm105 = vcmp.gt.f32.partialorder %v92, 0.5
    %vm106 = vcmp.gt.f32.partialorder %v93, 0.5
    %vm107 = vcmp.gt.f32.partialorder %v94, 0.5
    %v108 = vsel %vm100, 1, 0
    %v109 = vsel %vm101, 1, 0
    %v110 = vsel %vm102, 1, 0
    %v111 = vsel %vm103, 1, 0
    %v112 = vcvt.s32.f32 %v108
    %v113 = vcvt.s32.f32 %v109
    %v114 = vcvt.s32.f32 %v110
    %v115 = vcvt.s32.f32 %v111
    %v116 = vsel %vm104, 1, 0
    %v117 = vsel %vm105, 1, 0
    %v118 = vsel %vm106, 1, 0
    %v119 = vsel %vm107, 1, 0
    %v120 = vcvt.s32.f32 %v116
    %v121 = vcvt.s32.f32 %v117
    %v122 = vcvt.s32.f32 %v118
    %v123 = vcvt.s32.f32 %v119
    %v124 = vmul.f32 %v120, %v112
    %v125 = vmul.f32 %v121, %v113
    %v126 = vmul.f32 %v122, %v114
    %v127 = vmul.f32 %v123, %v115
    %v128 = vld [vmem:[%s3] sm:$0xff]
    %v129 = vadd.f32 %v112, %v113
    %v130 = vadd.f32 %v129, %v114
    %v131 = vadd.f32 %v130, %v115
    %v132 = vadd.f32 %v128, %v131
    %133 = vst [vmem:[%s3] sm:$0xff] %v132
    %s134 = scalar_lea.vmem %s3, 8
    %v135 = vld [vmem:[%s134] sm:$0xff]
    %v136 = vadd.f32 %v120, %v121
    %v137 = vadd.f32 %v136, %v122
    %v138 = vadd.f32 %v137, %v123
    %v139 = vadd.f32 %v135, %v138
    %140 = vst [vmem:[%s134] sm:$0xff] %v139
    %s141 = scalar_lea.vmem %s3, 16
    %v142 = vld [vmem:[%s141] sm:$0xff]
    %v143 = vadd.f32 %v124, %v125
    %v144 = vadd.f32 %v143, %v126
    %v145 = vadd.f32 %v144, %v127
    %v146 = vadd.f32 %v142, %v145
    %147 = vst [vmem:[%s141] sm:$0xff] %v146
  $region17: #{iou_metric.1} parent=0 // pred_fallthru
    _
  %p148 = scmp.gt.s32.totalorder %s95, %s84
  %p149 = scmp.lt.s32.totalorder %s86, %s84
  %p150 = pnand %p148, %p149
  %p151 = pneg %p150
  // Predicated region
  $region18: #{iou_metric.1} parent=0 // pred_check
    _
  $region19: #{iou_metric.1} parent=0 // pred_check_branch
    %153 = sbr.rel (%p150) target = $region21
  $region20: #{iou_metric.1} parent=0 // pred_region
    %v154 = vlaneseq
    %v155 = vshrl.u32 %v154, 7
    %v156 = vadd.s32 %v155, 8
    %v157 = vadd.s32 %v155, 16
    %v158 = vadd.s32 %v155, 24
    %v159 = vlaneseq
    %v160 = vand.u32 %v159, 127
    %s161 = ssub.s32 %s84, %s86
    %v162 = vmul.u32 %v155, 128
    %v163 = vmul.u32 %v156, 128
    %v164 = vmul.u32 %v157, 128
    %v165 = vmul.u32 %v158, 128
    %v166 = vstv %s161
    %v167 = vsub.s32 %v166, %v160
    %vm168 = vcmp.lt.s32.totalorder %v162, %v167
    %vm169 = vcmp.lt.s32.totalorder %v163, %v167
    %vm170 = vcmp.lt.s32.totalorder %v164, %v167
    %vm171 = vcmp.lt.s32.totalorder %v165, %v167
    %vm172 = vcmp.gt.f32.partialorder %v87, 0.5
    %vm173 = vcmp.gt.f32.partialorder %v88, 0.5
    %vm174 = vcmp.gt.f32.partialorder %v89, 0.5
    %vm175 = vcmp.gt.f32.partialorder %v90, 0.5
    %vm176 = vmand %vm172, %vm168
    %vm177 = vmand %vm173, %vm169
    %vm178 = vmand %vm174, %vm170
    %vm179 = vmand %vm175, %vm171
    %vm180 = vcmp.gt.f32.partialorder %v91, 0.5
    %vm181 = vcmp.gt.f32.partialorder %v92, 0.5
    %vm182 = vcmp.gt.f32.partialorder %v93, 0.5
    %vm183 = vcmp.gt.f32.partialorder %v94, 0.5
    %vm184 = vmand %vm180, %vm168
    %vm185 = vmand %vm181, %vm169
    %vm186 = vmand %vm182, %vm170
    %vm187 = vmand %vm183, %vm171
    %v188 = vsel %vm176, 1, 0
    %v189 = vsel %vm177, 1, 0
    %v190 = vsel %vm178, 1, 0
    %v191 = vsel %vm179, 1, 0
    %v192 = vcvt.s32.f32 %v188
    %v193 = vcvt.s32.f32 %v189
    %v194 = vcvt.s32.f32 %v190
    %v195 = vcvt.s32.f32 %v191
    %v196 = vsel %vm184, 1, 0
    %v197 = vsel %vm185, 1, 0
    %v198 = vsel %vm186, 1, 0
    %v199 = vsel %vm187, 1, 0
    %v200 = vcvt.s32.f32 %v196
    %v201 = vcvt.s32.f32 %v197
    %v202 = vcvt.s32.f32 %v198
    %v203 = vcvt.s32.f32 %v199
    %v204 = vmul.f32 %v200, %v192
    %v205 = vmul.f32 %v201, %v193
    %v206 = vmul.f32 %v202, %v194
    %v207 = vmul.f32 %v203, %v195
    %v208 = vld [vmem:[%s3] sm:$0xff]
    %v209 = vadd.f32 %v192, %v193
    %v210 = vadd.f32 %v209, %v194
    %v211 = vadd.f32 %v210, %v195
    %v212 = vadd.f32 %v208, %v211
    %213 = vst [vmem:[%s3] sm:$0xff] %v212
    %s214 = scalar_lea.vmem %s3, 8
    %v215 = vld [vmem:[%s214] sm:$0xff]
    %v216 = vadd.f32 %v200, %v201
    %v217 = vadd.f32 %v216, %v202
    %v218 = vadd.f32 %v217, %v203
    %v219 = vadd.f32 %v215, %v218
    %220 = vst [vmem:[%s214] sm:$0xff] %v219
    %s221 = scalar_lea.vmem %s3, 16
    %v222 = vld [vmem:[%s221] sm:$0xff]
    %v223 = vadd.f32 %v204, %v205
    %v224 = vadd.f32 %v223, %v206
    %v225 = vadd.f32 %v224, %v207
    %v226 = vadd.f32 %v222, %v225
    %227 = vst [vmem:[%s221] sm:$0xff] %v226
  $region21: #{iou_metric.1} parent=0 // pred_fallthru
    _
  // Predicated region
  $region22: #{iou_metric.1} parent=0 // pred_check
    _
  $region23: #{iou_metric.1} parent=0 // pred_check_branch
    %229 = sbr.rel (0) target = $region25
  $region24: #{iou_metric.1} parent=0 // pred_region
    _
  $region25: #{iou_metric.1} parent=0 // pred_fallthru
    _
  // Predicated region
  $region26: #{iou_metric.1} parent=0 // pred_check
    _
  $region27: #{iou_metric.1} parent=0 // pred_check_branch
    %231 = sbr.rel (0) target = $region29
  $region28: #{iou_metric.1} parent=0 // pred_region
    _
  $region29: #{iou_metric.1} parent=0 // pred_fallthru
    _

</llo_original>
